<compile_context>
chip_gen: v6e
topology: v6e:2x2x1
jax: 0.10.0
libtpu: 0.0.40
codegen_flags: <defaults>
</compile_context>

<pallas_src>
import functools

import jax
import jax.numpy as jnp
from jax import lax
from jax.experimental import pallas as pl
from jax.experimental.pallas import tpu as pltpu


# -----------------------------------------------------------------------------
# Kernel 1: fused Q/K/V projection   q/k/v = x @ W + b   (bf16 MXU, f32 acc)
# -----------------------------------------------------------------------------
def _qkv_proj_kernel(x_ref, wq_ref, bq_ref, wk_ref, bk_ref, wv_ref, bv_ref,
                     q_ref, k_ref, v_ref):
    x = x_ref[...]                                            # (TM, D) bf16
    q = jnp.dot(x, wq_ref[...], preferred_element_type=jnp.float32) + bq_ref[...]
    k = jnp.dot(x, wk_ref[...], preferred_element_type=jnp.float32) + bk_ref[...]
    v = jnp.dot(x, wv_ref[...], preferred_element_type=jnp.float32) + bv_ref[...]
    q_ref[...] = q.astype(q_ref.dtype)
    k_ref[...] = k.astype(k_ref.dtype)
    v_ref[...] = v.astype(v_ref.dtype)


# -----------------------------------------------------------------------------
# Kernel 2: flash-style ALiBi attention + output projection (online softmax)
#   grid = (B, n_q_tiles, n_kv_tiles); kv axis is innermost / "arbitrary".
# -----------------------------------------------------------------------------
def _alibi_flash_kernel(q_ref, k_ref, v_ref, wo_ref, bo_ref, o_ref,
                        m_scr, l_scr, acc_scr, *, n_heads, head_dim, scale):
    tq = q_ref.shape[0]
    tkv = k_ref.shape[0]
    ki = pl.program_id(2)
    nk = pl.num_programs(2)

    @pl.when(ki == 0)
    def _init():
        m_scr[...] = jnp.full_like(m_scr, -jnp.inf)
        l_scr[...] = jnp.zeros_like(l_scr)
        acc_scr[...] = jnp.zeros_like(acc_scr)

    # ALiBi relative positions for this (q_tile, kv_tile): rel[i, j] = k_pos - q_pos
    q_start = pl.program_id(1) * tq
    k_start = ki * tkv
    rel = (lax.broadcasted_iota(jnp.float32, (tq, tkv), 1)
           - lax.broadcasted_iota(jnp.float32, (tq, tkv), 0)
           + (k_start - q_start).astype(jnp.float32))

    q = q_ref[...]                                            # (TQ, D)  bf16
    k = k_ref[...]                                            # (TKV, D) bf16
    v = v_ref[...]                                            # (TKV, D) bf16

    for h in range(n_heads):                                  # static, small head count
        lo = h * head_dim
        hi = lo + head_dim
        qh = q[:, lo:hi]                                      # (TQ, hd)
        kh = k[:, lo:hi]                                      # (TKV, hd)
        vh = v[:, lo:hi]                                      # (TKV, hd)

        # (TQ, TKV) = qh @ kh^T without an explicit transpose (contract last axes).
        s = lax.dot_general(qh, kh, (((1,), (1,)), ((), ())),
                            preferred_element_type=jnp.float32)
        slope = 1.0 / (2.0 ** (float(h) / float(n_heads)))
        s = s * scale + slope * rel

        m_prev = m_scr[h]                                     # (TQ, 1) f32
        m_new = jnp.maximum(m_prev, jnp.max(s, axis=-1, keepdims=True))
        alpha = jnp.exp(m_prev - m_new)
        p = jnp.exp(s - m_new)                                # (TQ, TKV) f32
        l_scr[h] = alpha * l_scr[h] + jnp.sum(p, axis=-1, keepdims=True)
        acc_scr[:, lo:hi] = alpha * acc_scr[:, lo:hi] + jnp.dot(
            p.astype(v.dtype), vh, preferred_element_type=jnp.float32)
        m_scr[h] = m_new

    @pl.when(ki == nk - 1)
    def _finalize():
        # Normalize each head's slab by its softmax denominator (EUP reciprocal),
        # then apply the output projection on the full lane-dense (TQ, D) slab.
        for h in range(n_heads):
            lo = h * head_dim
            hi = lo + head_dim
            inv = pl.reciprocal(l_scr[h], approx=True)        # (TQ, 1)
            acc_scr[:, lo:hi] = acc_scr[:, lo:hi] * inv
        attn = acc_scr[...].astype(wo_ref.dtype)              # (TQ, D) bf16
        out = jnp.dot(attn, wo_ref[...],
                      preferred_element_type=jnp.float32) + bo_ref[...]
        o_ref[...] = out.astype(o_ref.dtype)


# -----------------------------------------------------------------------------
# Host-side wrapper
# -----------------------------------------------------------------------------
def _choose_tile(dim, target):
    """Largest divisor of `dim` of the form target/2^k (>=8); falls back to full dim."""
    if dim <= target:
        return dim
    t = target
    while t >= 8:
        if dim % t == 0:
            return t
        t //= 2
    return dim


def _maybe_vmem_limit(est_bytes):
    """Raise the scoped-VMEM limit only when needed; stay below v7x's 64 MiB."""
    if est_bytes <= 24 * 1024 * 1024:
        return None
    return min(2 * est_bytes, 48 * 1024 * 1024)


def alibi_attention(x, params, n_heads, *, tq=256, tkv=512, tproj=256):
    B, S, D = x.shape
    assert D % n_heads == 0
    head_dim = D // n_heads
    scale = float(head_dim) ** -0.5
    cdt = jnp.bfloat16

    # Glue: PyTorch Linear stores (out, in); kernels want (in, out). Cast to bf16.
    wq_t = params["wq"].T.astype(cdt)
    wk_t = params["wk"].T.astype(cdt)
    wv_t = params["wv"].T.astype(cdt)
    wo_t = params["wo"].T.astype(cdt)
    bq = params["bq"].reshape(1, D).astype(jnp.float32)
    bk = params["bk"].reshape(1, D).astype(jnp.float32)
    bv = params["bv"].reshape(1, D).astype(jnp.float32)
    bo = params["bo"].reshape(1, D).astype(jnp.float32)
    xc = x.astype(cdt)

    TM = _choose_tile(S, tproj)
    TQ = _choose_tile(S, tq)
    TKV = _choose_tile(S, tkv)

    # ------------------------- 1) fused QKV projection ------------------------
    seq_spec_p = pl.BlockSpec((pl.Squeezed(), TM, D), lambda b, m: (b, m, 0))
    w_spec_p = pl.BlockSpec((D, D), lambda b, m: (0, 0))
    b_spec_p = pl.BlockSpec((1, D), lambda b, m: (0, 0))

    proj_vmem = (2 * 4 * TM * D * 2          # double-buffered x/q/k/v tiles (bf16)
                 + 2 * 3 * D * D * 2         # double-buffered weights (bf16)
                 + 3 * D * 4)
    proj_cost = pl.CostEstimate(
        flops=6 * B * S * D * D,
        transcendentals=0,
        bytes_accessed=B * S * D * 2 * 4 + 3 * D * D * 2 + 3 * D * 4)

    q, k, v = pl.pallas_call(
        _qkv_proj_kernel,
        out_shape=(jax.ShapeDtypeStruct((B, S, D), cdt),
                   jax.ShapeDtypeStruct((B, S, D), cdt),
                   jax.ShapeDtypeStruct((B, S, D), cdt)),
        grid_spec=pltpu.PrefetchScalarGridSpec(
            num_scalar_prefetch=0,
            grid=(B, S // TM),
            in_specs=[seq_spec_p,
                      w_spec_p, b_spec_p,    # q_proj
                      w_spec_p, b_spec_p,    # k_proj
                      w_spec_p, b_spec_p],   # v_proj
            out_specs=[seq_spec_p, seq_spec_p, seq_spec_p]),
        compiler_params=pltpu.CompilerParams(
            dimension_semantics=("parallel", "parallel"),
            vmem_limit_bytes=_maybe_vmem_limit(proj_vmem)),
        cost_estimate=proj_cost,
    )(xc, wq_t, bq, wk_t, bk, wv_t, bv)

    # --------------- 2) flash attention (ALiBi) + output projection -----------
    q_spec = pl.BlockSpec((pl.Squeezed(), TQ, D), lambda b, qi, ki: (b, qi, 0))
    kv_spec = pl.BlockSpec((pl.Squeezed(), TKV, D), lambda b, qi, ki: (b, ki, 0))
    wo_spec = pl.BlockSpec((D, D), lambda b, qi, ki: (0, 0))
    bo_spec = pl.BlockSpec((1, D), lambda b, qi, ki: (0, 0))
    o_spec = pl.BlockSpec((pl.Squeezed(), TQ, D), lambda b, qi, ki: (b, qi, 0))

    attn_vmem = (2 * (TQ * D + 2 * TKV * D) * 2          # q/k/v tiles, double-buffered (bf16)
                 + 2 * D * D * 2 + D * 4                 # wo, bo
                 + 2 * TQ * D * x.dtype.itemsize         # output tile
                 + (2 * n_heads * TQ + TQ * D) * 4)      # f32 scratch (m, l, acc slab)
    attn_cost = pl.CostEstimate(
        flops=4 * B * S * S * D + 2 * B * S * D * D,
        transcendentals=B * n_heads * S * S,
        bytes_accessed=3 * B * S * D * 2 + D * D * 2 + D * 4
                       + B * S * D * x.dtype.itemsize)

    kernel = functools.partial(_alibi_flash_kernel,
                               n_heads=n_heads, head_dim=head_dim, scale=scale)

    return pl.pallas_call(
        kernel,
        out_shape=jax.ShapeDtypeStruct((B, S, D), x.dtype),
        grid_spec=pltpu.PrefetchScalarGridSpec(
            num_scalar_prefetch=0,
            grid=(B, S // TQ, S // TKV),
            in_specs=[q_spec, kv_spec, kv_spec, wo_spec, bo_spec],
            out_specs=o_spec,
            scratch_shapes=[pltpu.VMEM((n_heads, TQ, 1), jnp.float32),   # running max
                            pltpu.VMEM((n_heads, TQ, 1), jnp.float32),   # running sum
                            pltpu.VMEM((TQ, D), jnp.float32)]),          # per-head acc slab
        compiler_params=pltpu.CompilerParams(
            dimension_semantics=("parallel", "parallel", "arbitrary"),
            vmem_limit_bytes=_maybe_vmem_limit(attn_vmem)),
        cost_estimate=attn_cost,
    )(q, k, v, wo_t, bo)


# -----------------------------------------------------------------------------
# Pure-JAX reference (mirrors the PyTorch forward, mask=None), f32
# -----------------------------------------------------------------------------
def alibi_attention_reference(x, params, n_heads):
    B, S, D = x.shape
    hd = D // n_heads
    q = x @ params["wq"].T + params["bq"]
    k = x @ params["wk"].T + params["bk"]
    v = x @ params["wv"].T + params["bv"]
    Q = q.reshape(B, S, n_heads, hd)
    K = k.reshape(B, S, n_heads, hd)
    V = v.reshape(B, S, n_heads, hd)
    scores = jnp.einsum("bqhd,bkhd->bhqk", Q, K) * (float(hd) ** -0.5)
    slopes = 1.0 / 2.0 ** (jnp.arange(n_heads, dtype=jnp.float32) / n_heads)
    rel = (jnp.arange(S)[None, None, :] - jnp.arange(S)[None, :, None]).astype(jnp.float32)
    scores = scores + (slopes[:, None, None] * rel)[None]
    attn = jax.nn.softmax(scores, axis=-1)
    out = jnp.einsum("bhqk,bkhd->bqhd", attn, V).reshape(B, S, D)
    return out @ params["wo"].T + params["bo"]


def _init_params(key, d_model):
    """Deterministic PyTorch-Linear-style init: U(-1/sqrt(in), 1/sqrt(in))."""
    bound = 1.0 / (d_model ** 0.5)
    names = ["wq", "bq", "wk", "bk", "wv", "bv", "wo", "bo"]
    keys = jax.random.split(key, len(names))
    params = {}
    for name, kk in zip(names, keys):
        shape = (d_model, d_model) if name.startswith("w") else (d_model,)
        params[name] = jax.random.uniform(
            kk, shape, dtype=jnp.float32, minval=-bound, maxval=bound)
    return params


if __name__ == "__main__":
    B, S, D, H = 2, 8, 32, 4

    key = jax.random.PRNGKey(0)
    k_x, k_p = jax.random.split(key)
    x = jax.random.normal(k_x, (B, S, D), dtype=jnp.float32)
    params = _init_params(k_p, D)

    out = alibi_attention(x, params, n_heads=H)
    out = jax.block_until_ready(out)

    ref = alibi_attention_reference(x, params, n_heads=H)
    assert out.shape == (B, S, D)
    # bf16 matmul operands (f32 accumulation) vs. a pure-f32 reference -> loose tolerance.
    assert jnp.allclose(out, ref, rtol=5e-2, atol=5e-2), (
        f"max abs err {jnp.max(jnp.abs(out - ref))}")
    print("KERNEL_OK")
</pallas_src>

<mosaic_0001>
module attributes {stable_mosaic.version = 11 : i64} {
  func.func @_qkv_proj_kernel(%arg0: i32, %arg1: i32, %arg2: memref<1x8x32xbf16, #tpu.memory_space<vmem>>, %arg3: memref<32x32xbf16, #tpu.memory_space<vmem>>, %arg4: memref<1x32xf32, #tpu.memory_space<vmem>>, %arg5: memref<32x32xbf16, #tpu.memory_space<vmem>>, %arg6: memref<1x32xf32, #tpu.memory_space<vmem>>, %arg7: memref<32x32xbf16, #tpu.memory_space<vmem>>, %arg8: memref<1x32xf32, #tpu.memory_space<vmem>>, %arg9: memref<1x8x32xbf16, #tpu.memory_space<vmem>>, %arg10: memref<1x8x32xbf16, #tpu.memory_space<vmem>>, %arg11: memref<1x8x32xbf16, #tpu.memory_space<vmem>>) attributes {dimension_semantics = [#tpu.dimension_semantics<parallel>, #tpu.dimension_semantics<parallel>], iteration_bounds = array<i64: 2, 1>, scalar_prefetch = 0 : i64, scratch_operands = 0 : i64, tpu.core_type = #tpu.core_type<tc>, window_params = [{transform_indices = @transform_0, window_bounds = array<i64: 1, 8, 32>}, {pipeline_mode = #tpu.pipeline_mode<synchronous>, transform_indices = @transform_1, window_bounds = array<i64: 32, 32>}, {pipeline_mode = #tpu.pipeline_mode<synchronous>, transform_indices = @transform_2, window_bounds = array<i64: 1, 32>}, {pipeline_mode = #tpu.pipeline_mode<synchronous>, transform_indices = @transform_3, window_bounds = array<i64: 32, 32>}, {pipeline_mode = #tpu.pipeline_mode<synchronous>, transform_indices = @transform_4, window_bounds = array<i64: 1, 32>}, {pipeline_mode = #tpu.pipeline_mode<synchronous>, transform_indices = @transform_5, window_bounds = array<i64: 32, 32>}, {pipeline_mode = #tpu.pipeline_mode<synchronous>, transform_indices = @transform_6, window_bounds = array<i64: 1, 32>}, {transform_indices = @transform_7, window_bounds = array<i64: 1, 8, 32>}, {transform_indices = @transform_8, window_bounds = array<i64: 1, 8, 32>}, {transform_indices = @transform_9, window_bounds = array<i64: 1, 8, 32>}]} {
    %c0 = arith.constant 0 : index
    %c0_0 = arith.constant 0 : index
    %c0_1 = arith.constant 0 : index
    %0 = vector.load %arg2[%c0, %c0_0, %c0_1] : memref<1x8x32xbf16, #tpu.memory_space<vmem>>, vector<1x8x32xbf16>
    %1 = vector.shape_cast %0 : vector<1x8x32xbf16> to vector<8x32xbf16>
    %c0_2 = arith.constant 0 : index
    %c0_3 = arith.constant 0 : index
    %2 = vector.load %arg3[%c0_2, %c0_3] : memref<32x32xbf16, #tpu.memory_space<vmem>>, vector<32x32xbf16>
    %cst = arith.constant dense<0.000000e+00> : vector<8x32xf32>
    %3 = tpu.matmul %1, %2, %cst {dimension_numbers = #tpu.dot_dimension_numbers<[1], [0], [0], [1], [0, 0, 1, 1], [], []>} : vector<8x32xbf16>, vector<32x32xbf16>, vector<8x32xf32> -> vector<8x32xf32>
    %c0_4 = arith.constant 0 : index
    %c0_5 = arith.constant 0 : index
    %4 = vector.load %arg4[%c0_4, %c0_5] : memref<1x32xf32, #tpu.memory_space<vmem>>, vector<1x32xf32>
    %5 = vector.broadcast %4 : vector<1x32xf32> to vector<8x32xf32>
    %6 = arith.addf %3, %5 : vector<8x32xf32>
    %c0_6 = arith.constant 0 : index
    %c0_7 = arith.constant 0 : index
    %7 = vector.load %arg5[%c0_6, %c0_7] : memref<32x32xbf16, #tpu.memory_space<vmem>>, vector<32x32xbf16>
    %cst_8 = arith.constant dense<0.000000e+00> : vector<8x32xf32>
    %8 = tpu.matmul %1, %7, %cst_8 {dimension_numbers = #tpu.dot_dimension_numbers<[1], [0], [0], [1], [0, 0, 1, 1], [], []>} : vector<8x32xbf16>, vector<32x32xbf16>, vector<8x32xf32> -> vector<8x32xf32>
    %c0_9 = arith.constant 0 : index
    %c0_10 = arith.constant 0 : index
    %9 = vector.load %arg6[%c0_9, %c0_10] : memref<1x32xf32, #tpu.memory_space<vmem>>, vector<1x32xf32>
    %10 = vector.broadcast %9 : vector<1x32xf32> to vector<8x32xf32>
    %11 = arith.addf %8, %10 : vector<8x32xf32>
    %c0_11 = arith.constant 0 : index
    %c0_12 = arith.constant 0 : index
    %12 = vector.load %arg7[%c0_11, %c0_12] : memref<32x32xbf16, #tpu.memory_space<vmem>>, vector<32x32xbf16>
    %cst_13 = arith.constant dense<0.000000e+00> : vector<8x32xf32>
    %13 = tpu.matmul %1, %12, %cst_13 {dimension_numbers = #tpu.dot_dimension_numbers<[1], [0], [0], [1], [0, 0, 1, 1], [], []>} : vector<8x32xbf16>, vector<32x32xbf16>, vector<8x32xf32> -> vector<8x32xf32>
    %c0_14 = arith.constant 0 : index
    %c0_15 = arith.constant 0 : index
    %14 = vector.load %arg8[%c0_14, %c0_15] : memref<1x32xf32, #tpu.memory_space<vmem>>, vector<1x32xf32>
    %15 = vector.broadcast %14 : vector<1x32xf32> to vector<8x32xf32>
    %16 = arith.addf %13, %15 : vector<8x32xf32>
    %17 = arith.truncf %6 : vector<8x32xf32> to vector<8x32xbf16>
    %c0_16 = arith.constant 0 : index
    %c0_17 = arith.constant 0 : index
    %c0_18 = arith.constant 0 : index
    %18 = vector.load %arg9[%c0_16, %c0_17, %c0_18] : memref<1x8x32xbf16, #tpu.memory_space<vmem>>, vector<1x8x32xbf16>
    %19 = vector.shape_cast %18 : vector<1x8x32xbf16> to vector<8x32xbf16>
    %20 = vector.shape_cast %17 : vector<8x32xbf16> to vector<1x8x32xbf16>
    tpu.vector_store %arg9[%c0_16, %c0_17, %c0_18], %20 {strides = array<i32>} : memref<1x8x32xbf16, #tpu.memory_space<vmem>>, vector<1x8x32xbf16>,
    %21 = arith.truncf %11 : vector<8x32xf32> to vector<8x32xbf16>
    %c0_19 = arith.constant 0 : index
    %c0_20 = arith.constant 0 : index
    %c0_21 = arith.constant 0 : index
    %22 = vector.load %arg10[%c0_19, %c0_20, %c0_21] : memref<1x8x32xbf16, #tpu.memory_space<vmem>>, vector<1x8x32xbf16>
    %23 = vector.shape_cast %22 : vector<1x8x32xbf16> to vector<8x32xbf16>
    %24 = vector.shape_cast %21 : vector<8x32xbf16> to vector<1x8x32xbf16>
    tpu.vector_store %arg10[%c0_19, %c0_20, %c0_21], %24 {strides = array<i32>} : memref<1x8x32xbf16, #tpu.memory_space<vmem>>, vector<1x8x32xbf16>,
    %25 = arith.truncf %16 : vector<8x32xf32> to vector<8x32xbf16>
    %c0_22 = arith.constant 0 : index
    %c0_23 = arith.constant 0 : index
    %c0_24 = arith.constant 0 : index
    %26 = vector.load %arg11[%c0_22, %c0_23, %c0_24] : memref<1x8x32xbf16, #tpu.memory_space<vmem>>, vector<1x8x32xbf16>
    %27 = vector.shape_cast %26 : vector<1x8x32xbf16> to vector<8x32xbf16>
    %28 = vector.shape_cast %25 : vector<8x32xbf16> to vector<1x8x32xbf16>
    tpu.vector_store %arg11[%c0_22, %c0_23, %c0_24], %28 {strides = array<i32>} : memref<1x8x32xbf16, #tpu.memory_space<vmem>>, vector<1x8x32xbf16>,
    return
  }
  func.func @transform_0(%arg0: i32, %arg1: i32) -> (i32, i32, i32) {
    %c0_i32 = arith.constant 0 : i32
    %c0_i32_0 = arith.constant 0 : i32
    return %arg0, %arg1, %c0_i32 : i32, i32, i32
  }
  func.func @transform_1(%arg0: i32, %arg1: i32) -> (i32, i32) {
    %c0_i32 = arith.constant 0 : i32
    %c0_i32_0 = arith.constant 0 : i32
    %c0_i32_1 = arith.constant 0 : i32
    return %c0_i32, %c0_i32_0 : i32, i32
  }
  func.func @transform_2(%arg0: i32, %arg1: i32) -> (i32, i32) {
    %c0_i32 = arith.constant 0 : i32
    %c0_i32_0 = arith.constant 0 : i32
    %c0_i32_1 = arith.constant 0 : i32
    return %c0_i32, %c0_i32_0 : i32, i32
  }
  func.func @transform_3(%arg0: i32, %arg1: i32) -> (i32, i32) {
    %c0_i32 = arith.constant 0 : i32
    %c0_i32_0 = arith.constant 0 : i32
    %c0_i32_1 = arith.constant 0 : i32
    return %c0_i32, %c0_i32_0 : i32, i32
  }
  func.func @transform_4(%arg0: i32, %arg1: i32) -> (i32, i32) {
    %c0_i32 = arith.constant 0 : i32
    %c0_i32_0 = arith.constant 0 : i32
    %c0_i32_1 = arith.constant 0 : i32
    return %c0_i32, %c0_i32_0 : i32, i32
  }
  func.func @transform_5(%arg0: i32, %arg1: i32) -> (i32, i32) {
    %c0_i32 = arith.constant 0 : i32
    %c0_i32_0 = arith.constant 0 : i32
    %c0_i32_1 = arith.constant 0 : i32
    return %c0_i32, %c0_i32_0 : i32, i32
  }
  func.func @transform_6(%arg0: i32, %arg1: i32) -> (i32, i32) {
    %c0_i32 = arith.constant 0 : i32
    %c0_i32_0 = arith.constant 0 : i32
    %c0_i32_1 = arith.constant 0 : i32
    return %c0_i32, %c0_i32_0 : i32, i32
  }
  func.func @transform_7(%arg0: i32, %arg1: i32) -> (i32, i32, i32) {
    %c0_i32 = arith.constant 0 : i32
    %c0_i32_0 = arith.constant 0 : i32
    return %arg0, %arg1, %c0_i32 : i32, i32, i32
  }
  func.func @transform_8(%arg0: i32, %arg1: i32) -> (i32, i32, i32) {
    %c0_i32 = arith.constant 0 : i32
    %c0_i32_0 = arith.constant 0 : i32
    return %arg0, %arg1, %c0_i32 : i32, i32, i32
  }
  func.func @transform_9(%arg0: i32, %arg1: i32) -> (i32, i32, i32) {
    %c0_i32 = arith.constant 0 : i32
    %c0_i32_0 = arith.constant 0 : i32
    return %arg0, %arg1, %c0_i32 : i32, i32, i32
  }
}

</mosaic_0001>

<llo_original>
// kernel: tpu_custom_call.1
$region0: #{tpu_custom_call.1}
  #allocation0 [shape = 'u32[]', space=smem, size = 0x4, offset = 0x4, fixed_abs, tag = 'smem constant byte address 0x4 - core index']
  #allocation1 [shape = 'u32[144,128]{1,0:T(1,128)}', space=vmem, size = 0x12000, scoped, tag = 'internal scratch']
  %s0 = inlined_call_operand.hbm [shape: bf16[2,8,32], index: 0, kind: input, shape index: {}]
  %s1 = inlined_call_operand.hbm [shape: bf16[32,32], index: 1, kind: input, shape index: {}]
  %s2 = inlined_call_operand.vmem [shape: f32[1,32], index: 2, kind: input, shape index: {}]
  %s3 = inlined_call_operand.hbm [shape: bf16[32,32], index: 3, kind: input, shape index: {}]
  %s4 = inlined_call_operand.vmem [shape: f32[1,32], index: 4, kind: input, shape index: {}]
  %s5 = inlined_call_operand.hbm [shape: bf16[32,32], index: 5, kind: input, shape index: {}]
  %s6 = inlined_call_operand.vmem [shape: f32[1,32], index: 6, kind: input, shape index: {}]
  %s7 = inlined_call_operand.hbm [shape: bf16[2,8,32], index: 7, kind: output, shape index: {0}]
  %s8 = inlined_call_operand.hbm [shape: bf16[2,8,32], index: 8, kind: output, shape index: {1}]
  %s9 = inlined_call_operand.hbm [shape: bf16[2,8,32], index: 9, kind: output, shape index: {2}]
  %10 = xla_tuple %s7, %s8, %s9
  %s11 = sld [smem:[#allocation0]]
  $region93: #{tpu_custom_call.1} parent=0
    _
  %s13 = ssub.s32 1, %s11
  %s14 = scalar_select 0, %s13, %s11
  $region1: #{tpu_custom_call.1} parent=0
    #allocation2 [shape = 'u8[4096]{0}', space=vmem, size = 0x1000, scoped, tag = 'input window, operand 0']
    #allocation3 [shape = 's32[2]{0}', space=sflag, size = 0x8, scoped, tag = 'scoped memory for tpu_custom_call.1']
    #allocation4 [shape = 's32[2]{0}', space=sflag, size = 0x8, scoped, tag = 'scoped memory for tpu_custom_call.1']
    #allocation5 [shape = 'u8[8192]{0}', space=vmem, size = 0x2000, scoped, tag = 'input window, operand 1, single buffered']
    #allocation6 [shape = 's32[1]{0}', space=sflag, size = 0x4, scoped, tag = 'scoped memory for tpu_custom_call.1']
    #allocation7 [shape = 'u8[8192]{0}', space=vmem, size = 0x2000, scoped, tag = 'input window, operand 3, single buffered']
    #allocation8 [shape = 'u8[8192]{0}', space=vmem, size = 0x2000, scoped, tag = 'input window, operand 5, single buffered']
    #allocation9 [shape = 's32[1]{0}', space=sflag, size = 0x4, scoped, tag = 'scoped memory for tpu_custom_call.1']
    #allocation10 [shape = 'u8[4096]{0}', space=vmem, size = 0x1000, scoped, tag = 'output window, operand 0']
    #allocation11 [shape = 'u8[4096]{0}', space=vmem, size = 0x1000, scoped, tag = 'output window, operand 1']
    #allocation12 [shape = 's32[2]{0}', space=sflag, size = 0x8, scoped, tag = 'scoped memory for tpu_custom_call.1']
    #allocation13 [shape = 'u8[4096]{0}', space=vmem, size = 0x1000, scoped, tag = 'output window, operand 2']
    %15 = vsyncpa [#allocation3], 0
    %s16 = scalar_lea.sflag [#allocation3], 1
    %17 = vsyncpa %s16, 0
    %18 = vsyncpa [#allocation6], 0
    %19 = vsyncpa [#allocation9], 0
    %20 = vsyncpa [#allocation4], 0
    %s21 = scalar_lea.sflag [#allocation4], 1
    %22 = vsyncpa %s21, 0
    %23 = vsyncpa [#allocation12], 0
    %s24 = scalar_lea.sflag [#allocation12], 1
    %25 = vsyncpa %s24, 0
    loop: start=0, step=1, limit=4
    $region2: #{tpu_custom_call.1} parent=1 // loop_pre_header
      _
    $region3: #{tpu_custom_call.1} parent=1 // loop_header
      %s27 = sphi 0, %s31
      %p28 = scmp.ge.s32.totalorder %s27, 4
      %s34 = sphi 0, %s46
      %s35 = sphi 0, %s42
      %s36 = sphi 0, %s34
      %s37 = sphi 0, %s35
      %s38 = sphi 0, %s36
      %s39 = sphi 0, %s37
      %s51 = sphi 0, %s53
      %s54 = sphi 0, %s51
      %s55 = sphi 0, %s54
      %s71 = sphi 0, %s55
      %s75 = sphi 0, %s75
      %s77 = sphi 0, %s75
      %s78 = sphi 0, %s77
      %s92 = sphi 0, %s78
      %s96 = sphi 0, %s96
      %s98 = sphi 0, %s96
      %s99 = sphi 0, %s98
      %s113 = sphi 0, %s99
      %s117 = sphi 0, %s117
      %s119 = sphi 0, %s117
      %s120 = sphi 0, %s119
      %s134 = sphi 0, %s120
      %s138 = sphi 0, %s138
      %s140 = sphi 0, %s138
      %s141 = sphi 0, %s140
      %s155 = sphi 0, %s141
      %s159 = sphi 0, %s159
      %s161 = sphi 0, %s159
      %s162 = sphi 0, %s161
      %s176 = sphi 0, %s162
      %s180 = sphi 0, %s180
      %s182 = sphi 0, %s180
      %s183 = sphi 0, %s182
      %s197 = sphi 0, %s183
      %s205 = sphi 0, %s207
      %s208 = sphi 0, %s205
      %s209 = sphi 0, %s208
      %s225 = sphi 0, %s209
      %s233 = sphi 0, %s235
      %s236 = sphi 0, %s233
      %s237 = sphi 0, %s236
      %s253 = sphi 0, %s237
      %s261 = sphi 0, %s263
      %s264 = sphi 0, %s261
      %s265 = sphi 0, %s264
      %s281 = sphi 0, %s265
    $region4: #{tpu_custom_call.1} parent=1 // loop_header_branch
      %30 = sbr.rel (%p28) target = $region8
    $region5: #{tpu_custom_call.1} parent=1 // loop_body
      %s32 = ssub.s32 %s27, 1
      %s33 = ssub.s32 %s27, 2
      %s40 = sadd.s32 1, %s35
      %p41 = scmp.ge.s32.totalorder %s40, 1
      %s42 = scalar_select %p41, 0, %s40
      %s43 = sadd.s32 1, %s34
      %s44 = scalar_select %p41, %s43, %s34
      %p45 = scmp.ge.s32.totalorder %s44, 2
      %s46 = scalar_select %p45, 0, %s44
      %s47 = ssub.s32 %s34, %s46
      %s48 = ssub.s32 %s35, %s42
      %s49 = sor.u32 %s47, %s48
      %p50 = scmp.eq.s32.totalorder %s49, 0
      %s52 = sadd.s32 %s51, 1
      %s53 = scalar_select %p50, %s51, %s52
      %p56 = pneg %p50
      %p57 = scmp.eq.s32.totalorder %s27, 1
      %p58 = por %p56, %p57
      %p59 = scmp.ne.s32.totalorder %s51, %s54
      %p60 = scmp.eq.s32.totalorder %s27, 0
      %p61 = por %p59, %p60
      %p62 = scmp.ne.s32.totalorder %s51, %s54
      %p63 = scmp.eq.s32.totalorder %s32, 1
      %p64 = por %p62, %p63
      %p65 = scmp.ne.s32.totalorder %s54, %s55
      %p66 = scmp.eq.s32.totalorder %s32, 0
      %p67 = por %p65, %p66
      %p68 = scmp.ne.s32.totalorder %s54, %s55
      %p69 = scmp.eq.s32.totalorder %s33, 1
      %p70 = por %p68, %p69
      %p72 = scmp.ne.s32.totalorder %s55, %s71
      %p73 = scmp.eq.s32.totalorder %s33, 0
      %p74 = por %p72, %p73
      %s76 = sadd.s32 %s75, 1
      %p79 = scmp.eq.s32.totalorder %s27, 1
      %p80 = scmp.ne.s32.totalorder %s75, %s77
      %p81 = scmp.eq.s32.totalorder %s27, 0
      %p82 = por %p80, %p81
      %p83 = scmp.ne.s32.totalorder %s75, %s77
      %p84 = scmp.eq.s32.totalorder %s32, 1
      %p85 = por %p83, %p84
      %p86 = scmp.ne.s32.totalorder %s77, %s78
      %p87 = scmp.eq.s32.totalorder %s32, 0
      %p88 = por %p86, %p87
      %p89 = scmp.ne.s32.totalorder %s77, %s78
      %p90 = scmp.eq.s32.totalorder %s33, 1
      %p91 = por %p89, %p90
      %p93 = scmp.ne.s32.totalorder %s78, %s92
      %p94 = scmp.eq.s32.totalorder %s33, 0
      %p95 = por %p93, %p94
      %s97 = sadd.s32 %s96, 1
      %p100 = scmp.eq.s32.totalorder %s27, 1
      %p101 = scmp.ne.s32.totalorder %s96, %s98
      %p102 = scmp.eq.s32.totalorder %s27, 0
      %p103 = por %p101, %p102
      %p104 = scmp.ne.s32.totalorder %s96, %s98
      %p105 = scmp.eq.s32.totalorder %s32, 1
      %p106 = por %p104, %p105
      %p107 = scmp.ne.s32.totalorder %s98, %s99
      %p108 = scmp.eq.s32.totalorder %s32, 0
      %p109 = por %p107, %p108
      %p110 = scmp.ne.s32.totalorder %s98, %s99
      %p111 = scmp.eq.s32.totalorder %s33, 1
      %p112 = por %p110, %p111
      %p114 = scmp.ne.s32.totalorder %s99, %s113
      %p115 = scmp.eq.s32.totalorder %s33, 0
      %p116 = por %p114, %p115
      %s118 = sadd.s32 %s117, 1
      %p121 = scmp.eq.s32.totalorder %s27, 1
      %p122 = scmp.ne.s32.totalorder %s117, %s119
      %p123 = scmp.eq.s32.totalorder %s27, 0
      %p124 = por %p122, %p123
      %p125 = scmp.ne.s32.totalorder %s117, %s119
      %p126 = scmp.eq.s32.totalorder %s32, 1
      %p127 = por %p125, %p126
      %p128 = scmp.ne.s32.totalorder %s119, %s120
      %p129 = scmp.eq.s32.totalorder %s32, 0
      %p130 = por %p128, %p129
      %p131 = scmp.ne.s32.totalorder %s119, %s120
      %p132 = scmp.eq.s32.totalorder %s33, 1
      %p133 = por %p131, %p132
      %p135 = scmp.ne.s32.totalorder %s120, %s134
      %p136 = scmp.eq.s32.totalorder %s33, 0
      %p137 = por %p135, %p136
      %s139 = sadd.s32 %s138, 1
      %p142 = scmp.eq.s32.totalorder %s27, 1
      %p143 = scmp.ne.s32.totalorder %s138, %s140
      %p144 = scmp.eq.s32.totalorder %s27, 0
      %p145 = por %p143, %p144
      %p146 = scmp.ne.s32.totalorder %s138, %s140
      %p147 = scmp.eq.s32.totalorder %s32, 1
      %p148 = por %p146, %p147
      %p149 = scmp.ne.s32.totalorder %s140, %s141
      %p150 = scmp.eq.s32.totalorder %s32, 0
      %p151 = por %p149, %p150
      %p152 = scmp.ne.s32.totalorder %s140, %s141
      %p153 = scmp.eq.s32.totalorder %s33, 1
      %p154 = por %p152, %p153
      %p156 = scmp.ne.s32.totalorder %s141, %s155
      %p157 = scmp.eq.s32.totalorder %s33, 0
      %p158 = por %p156, %p157
      %s160 = sadd.s32 %s159, 1
      %p163 = scmp.eq.s32.totalorder %s27, 1
      %p164 = scmp.ne.s32.totalorder %s159, %s161
      %p165 = scmp.eq.s32.totalorder %s27, 0
      %p166 = por %p164, %p165
      %p167 = scmp.ne.s32.totalorder %s159, %s161
      %p168 = scmp.eq.s32.totalorder %s32, 1
      %p169 = por %p167, %p168
      %p170 = scmp.ne.s32.totalorder %s161, %s162
      %p171 = scmp.eq.s32.totalorder %s32, 0
      %p172 = por %p170, %p171
      %p173 = scmp.ne.s32.totalorder %s161, %s162
      %p174 = scmp.eq.s32.totalorder %s33, 1
      %p175 = por %p173, %p174
      %p177 = scmp.ne.s32.totalorder %s162, %s176
      %p178 = scmp.eq.s32.totalorder %s33, 0
      %p179 = por %p177, %p178
      %s181 = sadd.s32 %s180, 1
      %p184 = scmp.eq.s32.totalorder %s27, 1
      %p185 = scmp.ne.s32.totalorder %s180, %s182
      %p186 = scmp.eq.s32.totalorder %s27, 0
      %p187 = por %p185, %p186
      %p188 = scmp.ne.s32.totalorder %s180, %s182
      %p189 = scmp.eq.s32.totalorder %s32, 1
      %p190 = por %p188, %p189
      %p191 = scmp.ne.s32.totalorder %s182, %s183
      %p192 = scmp.eq.s32.totalorder %s32, 0
      %p193 = por %p191, %p192
      %p194 = scmp.ne.s32.totalorder %s182, %s183
      %p195 = scmp.eq.s32.totalorder %s33, 1
      %p196 = por %p194, %p195
      %p198 = scmp.ne.s32.totalorder %s183, %s197
      %p199 = scmp.eq.s32.totalorder %s33, 0
      %p200 = por %p198, %p199
      %s201 = ssub.s32 %s34, %s46
      %s202 = ssub.s32 %s35, %s42
      %s203 = sor.u32 %s201, %s202
      %p204 = scmp.eq.s32.totalorder %s203, 0
      %s206 = sadd.s32 %s205, 1
      %s207 = scalar_select %p204, %s205, %s206
      %p210 = pneg %p204
      %p211 = scmp.eq.s32.totalorder %s27, 1
      %p212 = por %p210, %p211
      %p213 = scmp.ne.s32.totalorder %s205, %s208
      %p214 = scmp.eq.s32.totalorder %s27, 0
      %p215 = por %p213, %p214
      %p216 = scmp.ne.s32.totalorder %s205, %s208
      %p217 = scmp.eq.s32.totalorder %s32, 1
      %p218 = por %p216, %p217
      %p219 = scmp.ne.s32.totalorder %s208, %s209
      %p220 = scmp.eq.s32.totalorder %s32, 0
      %p221 = por %p219, %p220
      %p222 = scmp.ne.s32.totalorder %s208, %s209
      %p223 = scmp.eq.s32.totalorder %s33, 1
      %p224 = por %p222, %p223
      %p226 = scmp.ne.s32.totalorder %s209, %s225
      %p227 = scmp.eq.s32.totalorder %s33, 0
      %p228 = por %p226, %p227
      %s229 = ssub.s32 %s34, %s46
      %s230 = ssub.s32 %s35, %s42
      %s231 = sor.u32 %s229, %s230
      %p232 = scmp.eq.s32.totalorder %s231, 0
      %s234 = sadd.s32 %s233, 1
      %s235 = scalar_select %p232, %s233, %s234
      %p238 = pneg %p232
      %p239 = scmp.eq.s32.totalorder %s27, 1
      %p240 = por %p238, %p239
      %p241 = scmp.ne.s32.totalorder %s233, %s236
      %p242 = scmp.eq.s32.totalorder %s27, 0
      %p243 = por %p241, %p242
      %p244 = scmp.ne.s32.totalorder %s233, %s236
      %p245 = scmp.eq.s32.totalorder %s32, 1
      %p246 = por %p244, %p245
      %p247 = scmp.ne.s32.totalorder %s236, %s237
      %p248 = scmp.eq.s32.totalorder %s32, 0
      %p249 = por %p247, %p248
      %p250 = scmp.ne.s32.totalorder %s236, %s237
      %p251 = scmp.eq.s32.totalorder %s33, 1
      %p252 = por %p250, %p251
      %p254 = scmp.ne.s32.totalorder %s237, %s253
      %p255 = scmp.eq.s32.totalorder %s33, 0
      %p256 = por %p254, %p255
      %s257 = ssub.s32 %s34, %s46
      %s258 = ssub.s32 %s35, %s42
      %s259 = sor.u32 %s257, %s258
      %p260 = scmp.eq.s32.totalorder %s259, 0
      %s262 = sadd.s32 %s261, 1
      %s263 = scalar_select %p260, %s261, %s262
      %p266 = pneg %p260
      %p267 = scmp.eq.s32.totalorder %s27, 1
      %p268 = por %p266, %p267
      %p269 = scmp.ne.s32.totalorder %s261, %s264
      %p270 = scmp.eq.s32.totalorder %s27, 0
      %p271 = por %p269, %p270
      %p272 = scmp.ne.s32.totalorder %s261, %s264
      %p273 = scmp.eq.s32.totalorder %s32, 1
      %p274 = por %p272, %p273
      %p275 = scmp.ne.s32.totalorder %s264, %s265
      %p276 = scmp.eq.s32.totalorder %s32, 0
      %p277 = por %p275, %p276
      %p278 = scmp.ne.s32.totalorder %s264, %s265
      %p279 = scmp.eq.s32.totalorder %s33, 1
      %p280 = por %p278, %p279
      %p282 = scmp.ne.s32.totalorder %s265, %s281
      %p283 = scmp.eq.s32.totalorder %s33, 0
      %p284 = por %p282, %p283
      %p285 = scmp.le.s32.totalorder 1, %s27
      %p286 = scmp.lt.s32.totalorder %s27, 3
      %p287 = pnand %p285, %p286
      %p288 = pneg %p287
      // Predicated region
      $region9: #{tpu_custom_call.1} parent=5 // pred_check
        _
      $region10: #{tpu_custom_call.1} parent=5 // pred_check_branch
        %290 = sbr.rel (%p287) target = $region12
      $region11: #{tpu_custom_call.1} parent=5 // pred_region
        %s291 = ssub.s32 %s27, 1
        // Predicated region
        $region13: #{tpu_custom_call.1} parent=11 // pred_check
          %p292 = pneg %p88
        $region14: #{tpu_custom_call.1} parent=11 // pred_check_branch
          %294 = sbr.rel (%p292) target = $region16
        $region15: #{tpu_custom_call.1} parent=11 // pred_region
          %s296 = ssub.s32 256, 256
          %297 = vsyncadd [#allocation6], %s296
          %s298 = sshll.u32 [#allocation5], 4
          %s299 = int_to_ptr.vmem [resolvable:$true] %s298
          %304 = dma.hbm_to_vmem [thread:$0]  %s1, 256, %s299, [#allocation6], 64, 64, 4
        $region16: #{tpu_custom_call.1} parent=11 // pred_fallthru
          _
        // Predicated region
        $region17: #{tpu_custom_call.1} parent=11 // pred_check
          %p305 = pneg %p109
        $region18: #{tpu_custom_call.1} parent=11 // pred_check_branch
          %307 = sbr.rel (%p305) target = $region20
        $region19: #{tpu_custom_call.1} parent=11 // pred_region
          _
        $region20: #{tpu_custom_call.1} parent=11 // pred_fallthru
          _
        // Predicated region
        $region21: #{tpu_custom_call.1} parent=11 // pred_check
          %p308 = pneg %p130
        $region22: #{tpu_custom_call.1} parent=11 // pred_check_branch
          %310 = sbr.rel (%p308) target = $region24
        $region23: #{tpu_custom_call.1} parent=11 // pred_region
          %s312 = ssub.s32 256, 256
          %313 = vsyncadd [#allocation6], %s312
          %s314 = sshll.u32 [#allocation7], 4
          %s315 = int_to_ptr.vmem [resolvable:$true] %s314
          %320 = dma.hbm_to_vmem [thread:$0]  %s3, 256, %s315, [#allocation6], 64, 64, 4
        $region24: #{tpu_custom_call.1} parent=11 // pred_fallthru
          _
        // Predicated region
        $region25: #{tpu_custom_call.1} parent=11 // pred_check
          %p321 = pneg %p151
        $region26: #{tpu_custom_call.1} parent=11 // pred_check_branch
          %323 = sbr.rel (%p321) target = $region28
        $region27: #{tpu_custom_call.1} parent=11 // pred_region
          _
        $region28: #{tpu_custom_call.1} parent=11 // pred_fallthru
          _
        // Predicated region
        $region29: #{tpu_custom_call.1} parent=11 // pred_check
          %p324 = pneg %p172
        $region30: #{tpu_custom_call.1} parent=11 // pred_check_branch
          %326 = sbr.rel (%p324) target = $region32
        $region31: #{tpu_custom_call.1} parent=11 // pred_region
          %s328 = ssub.s32 256, 256
          %329 = vsyncadd [#allocation9], %s328
          %s330 = sshll.u32 [#allocation8], 4
          %s331 = int_to_ptr.vmem [resolvable:$true] %s330
          %336 = dma.hbm_to_vmem [thread:$0]  %s5, 256, %s331, [#allocation9], 64, 64, 4
        $region32: #{tpu_custom_call.1} parent=11 // pred_fallthru
          _
        // Predicated region
        $region33: #{tpu_custom_call.1} parent=11 // pred_check
          %p337 = pneg %p193
        $region34: #{tpu_custom_call.1} parent=11 // pred_check_branch
          %339 = sbr.rel (%p337) target = $region36
        $region35: #{tpu_custom_call.1} parent=11 // pred_region
          _
        $region36: #{tpu_custom_call.1} parent=11 // pred_fallthru
          _
      $region12: #{tpu_custom_call.1} parent=5 // pred_fallthru
        _
      %p340 = scmp.lt.s32.totalorder %s27, 2
      // Predicated region
      $region37: #{tpu_custom_call.1} parent=5 // pred_check
        %p341 = pneg %p340
      $region38: #{tpu_custom_call.1} parent=5 // pred_check_branch
        %343 = sbr.rel (%p341) target = $region40
      $region39: #{tpu_custom_call.1} parent=5 // pred_region
        // Predicated region
        $region41: #{tpu_custom_call.1} parent=39 // pred_check
          %p344 = pneg %p61
        $region42: #{tpu_custom_call.1} parent=39 // pred_check_branch
          %346 = sbr.rel (%p344) target = $region44
        $region43: #{tpu_custom_call.1} parent=39 // pred_region
          %s347 = sand.u32 %s51, 1
          %s348 = scalar_lea.sflag [#allocation3], %s347
          %s349 = sand.u32 %s51, 1
          %s350 = smul.addr %s349, 4
          %s351 = scalar_lea.vmem [#allocation2], %s350
          %s353 = ssub.s32 64, 64
          %354 = vsyncadd %s348, %s353
          %s355 = sadd.s32 %s35, %s34
          %s356 = smul.addr %s355, 64
          %s357 = scalar_lea.hbm %s0, %s356
          %s359 = sshll.u32 %s351, 4
          %s360 = int_to_ptr.vmem [resolvable:$true] %s359
          %362 = dma.hbm_to_vmem [thread:$0]  %s357, 64, %s360, %s348
        $region44: #{tpu_custom_call.1} parent=39 // pred_fallthru
          _
      $region40: #{tpu_custom_call.1} parent=5 // pred_fallthru
        _
      %p363 = scmp.le.s32.totalorder 1, %s27
      %p364 = scmp.lt.s32.totalorder %s27, 3
      %p365 = pnand %p363, %p364
      %p366 = pneg %p365
      // Predicated region
      $region45: #{tpu_custom_call.1} parent=5 // pred_check
        _
      $region46: #{tpu_custom_call.1} parent=5 // pred_check_branch
        %368 = sbr.rel (%p365) target = $region48
      $region47: #{tpu_custom_call.1} parent=5 // pred_region
        %s369 = ssub.s32 %s27, 1
        %s370 = sand.u32 %s54, 1
        %s371 = scalar_lea.sflag [#allocation3], %s370
        %s372 = sand.u32 %s54, 1
        %s373 = smul.addr %s372, 4
        %s374 = scalar_lea.vmem [#allocation2], %s373
        // Predicated region
        $region49: #{tpu_custom_call.1} parent=47 // pred_check
          %p375 = pneg %p67
        $region50: #{tpu_custom_call.1} parent=47 // pred_check_branch
          %377 = sbr.rel (%p375) target = $region52
        $region51: #{tpu_custom_call.1} parent=47 // pred_region
          %378 = dma.done %s371, 64
        $region52: #{tpu_custom_call.1} parent=47 // pred_fallthru
          _
        // Predicated region
        $region53: #{tpu_custom_call.1} parent=47 // pred_check
          %p379 = pneg %p88
        $region54: #{tpu_custom_call.1} parent=47 // pred_check_branch
          %381 = sbr.rel (%p379) target = $region56
        $region55: #{tpu_custom_call.1} parent=47 // pred_region
          %382 = dma.done [#allocation6], 256
        $region56: #{tpu_custom_call.1} parent=47 // pred_fallthru
          _
        // Predicated region
        $region57: #{tpu_custom_call.1} parent=47 // pred_check
          %p383 = pneg %p130
        $region58: #{tpu_custom_call.1} parent=47 // pred_check_branch
          %385 = sbr.rel (%p383) target = $region60
        $region59: #{tpu_custom_call.1} parent=47 // pred_region
          %386 = dma.done [#allocation6], 256
        $region60: #{tpu_custom_call.1} parent=47 // pred_fallthru
          _
        // Predicated region
        $region61: #{tpu_custom_call.1} parent=47 // pred_check
          %p387 = pneg %p172
        $region62: #{tpu_custom_call.1} parent=47 // pred_check_branch
          %389 = sbr.rel (%p387) target = $region64
        $region63: #{tpu_custom_call.1} parent=47 // pred_region
          %390 = dma.done [#allocation9], 256
        $region64: #{tpu_custom_call.1} parent=47 // pred_fallthru
          _
        %s391 = sand.u32 %s54, 1
        %s392 = scalar_lea.sflag [#allocation3], %s391
        %s393 = sand.u32 %s54, 1
        %s394 = smul.addr %s393, 4
        %s395 = scalar_lea.vmem [#allocation2], %s394
        %p396 = pneg %p67
        %p397 = pneg %p64
        %p398 = pneg %p88
        %p399 = pneg %p85
        %p400 = pneg %p109
        %p401 = pneg %p106
        %p402 = pneg %p130
        %p403 = pneg %p127
        %p404 = pneg %p151
        %p405 = pneg %p148
        %p406 = pneg %p172
        %p407 = pneg %p169
        %p408 = pneg %p193
        %p409 = pneg %p190
        %p410 = pneg %p221
        %p411 = pneg %p218
        %s412 = sand.u32 %s208, 1
        %s413 = scalar_lea.sflag [#allocation4], %s412
        %s414 = sand.u32 %s208, 1
        %s415 = smul.addr %s414, 4
        %s416 = scalar_lea.vmem [#allocation10], %s415
        %p417 = pneg %p249
        %p418 = pneg %p246
        %s419 = sand.u32 %s32, 1
        %s420 = scalar_lea.sflag [#allocation12], %s419
        %s421 = sand.u32 %s236, 1
        %s422 = smul.addr %s421, 4
        %s423 = scalar_lea.vmem [#allocation11], %s422
        %p424 = pneg %p277
        %p425 = pneg %p274
        %s426 = sand.u32 %s32, 1
        %s427 = scalar_lea.sflag [#allocation12], %s426
        %s428 = sand.u32 %s264, 1
        %s429 = smul.addr %s428, 4
        %s430 = scalar_lea.vmem [#allocation13], %s429
        %v432 = vld [vmem:[%s374] sm:$0xf]
        %v433 = vld [vmem:[#allocation5] sm:$0xf]
        %v434 = vld [vmem:[#allocation5 + $0x4] sm:$0xf]
        %v435 = vld [vmem:[#allocation5 + $0x8] sm:$0xf]
        %v436 = vld [vmem:[#allocation5 + $0xc] sm:$0xf]
        %v437 = vld [vmem:[%s2] sm:$0x1]
        %v439 = vlaneseq
        %v440 = vshrl.u32 %v439, 7
        %v441 = vsub.s32 0, %v440
        %v442 = vrot.slane %v437, %v441
        %v448 = vunpack.c.l.b16 %v433
        %v449 = vunpack.c.l.b16 %v434
        %v450 = vunpack.c.l.b16 %v435
        %v451 = vunpack.c.l.b16 %v436
        %v452 = vpack.c.b16 %v449, %v448
        %v453 = vpack.c.b16 %v451, %v450
        %vm456 = vcmask 261120
        %v458 = vsel %vm456, %v432, 0
        %460 = vmatprep.subr.bf16.mxu0 0
        %461 = vmatpush1.bf16.msra.mxu0 0
        %462 = vmatprep.subr.bf16.mxu0 0
        %463 = vmatpush1.bf16.msra.mxu0 0
        %464 = vmatprep.subr.bf16.mxu0 0
        %465 = vmatpush1.bf16.msra.mxu0 0
        %466 = vmatprep.subr.bf16.mxu0 0
        %467 = vmatpush1.bf16.msra.mxu0 0
        %468 = vmatprep.subr.bf16.mxu0 0
        %469 = vmatpush1.bf16.msra.mxu0 0
        %470 = vmatprep.subr.bf16.mxu0 0
        %471 = vmatpush1.bf16.msra.mxu0 0
        %472 = vmatprep.subr.bf16.mxu0 0
        %473 = vmatpush1.bf16.msra.mxu0 %v453
        %474 = vmatprep.subr.bf16.mxu0 0
        %475 = vmatpush1.bf16.msra.mxu0 %v452
        %476 = vmatprep.subr.bf16.mxu0 0
        %477 = vmatpush2.bf16.msra.mxu0 0
        %478 = vmatprep.subr.bf16.mxu0 0
        %479 = vmatpush2.bf16.msra.mxu0 0
        %480 = vmatprep.subr.bf16.mxu0 0
        %481 = vmatpush2.bf16.msra.mxu0 0
        %482 = vmatprep.subr.bf16.mxu0 0
        %483 = vmatpush2.bf16.msra.mxu0 0
        %484 = vmatprep.subr.bf16.mxu0 0
        %485 = vmatpush2.bf16.msra.mxu0 0
        %486 = vmatprep.subr.bf16.mxu0 0
        %487 = vmatpush2.bf16.msra.mxu0 0
        %488 = vmatprep.subr.bf16.mxu0 0
        %489 = vmatpush2.bf16.msra.mxu0 0
        %490 = vmatprep.subr.bf16.mxu0 0
        %491 = vmatpush2.bf16.msra.mxu0 0
        %492 = vmatprep.mubr.bf16.mxu0 0
        %493 = vmatmul.mubr.bf16.gmra.mxu0 %v458
        %v494 = vpop.f32.mrf.mxu0
        %v495 = vadd.f32 %v442, %v494
        %v496 = vpop.f32.mrf.mxu0
        %v497 = vpop.f32.mrf.mxu0
        %v498 = vpop.f32.mrf.mxu0
        %499 = vdwg.mxu0
        %v500 = vld [vmem:[#allocation7] sm:$0xf]
        %v501 = vld [vmem:[#allocation7 + $0x4] sm:$0xf]
        %v502 = vld [vmem:[#allocation7 + $0x8] sm:$0xf]
        %v503 = vld [vmem:[#allocation7 + $0xc] sm:$0xf]
        %v504 = vld [vmem:[%s4] sm:$0x1]
        %v506 = vlaneseq
        %v507 = vshrl.u32 %v506, 7
        %v508 = vsub.s32 0, %v507
        %v509 = vrot.slane %v504, %v508
        %v515 = vunpack.c.l.b16 %v500
        %v516 = vunpack.c.l.b16 %v501
        %v517 = vunpack.c.l.b16 %v502
        %v518 = vunpack.c.l.b16 %v503
        %v519 = vpack.c.b16 %v516, %v515
        %v520 = vpack.c.b16 %v518, %v517
        %523 = vmatprep.subr.bf16.mxu0 0
        %524 = vmatpush1.bf16.msra.mxu0 0
        %525 = vmatprep.subr.bf16.mxu0 0
        %526 = vmatpush1.bf16.msra.mxu0 0
        %527 = vmatprep.subr.bf16.mxu0 0
        %528 = vmatpush1.bf16.msra.mxu0 0
        %529 = vmatprep.subr.bf16.mxu0 0
        %530 = vmatpush1.bf16.msra.mxu0 0
        %531 = vmatprep.subr.bf16.mxu0 0
        %532 = vmatpush1.bf16.msra.mxu0 0
        %533 = vmatprep.subr.bf16.mxu0 0
        %534 = vmatpush1.bf16.msra.mxu0 0
        %535 = vmatprep.subr.bf16.mxu0 0
        %536 = vmatpush1.bf16.msra.mxu0 %v520
        %537 = vmatprep.subr.bf16.mxu0 0
        %538 = vmatpush1.bf16.msra.mxu0 %v519
        %539 = vmatprep.subr.bf16.mxu0 0
        %540 = vmatpush2.bf16.msra.mxu0 0
        %541 = vmatprep.subr.bf16.mxu0 0
        %542 = vmatpush2.bf16.msra.mxu0 0
        %543 = vmatprep.subr.bf16.mxu0 0
        %544 = vmatpush2.bf16.msra.mxu0 0
        %545 = vmatprep.subr.bf16.mxu0 0
        %546 = vmatpush2.bf16.msra.mxu0 0
        %547 = vmatprep.subr.bf16.mxu0 0
        %548 = vmatpush2.bf16.msra.mxu0 0
        %549 = vmatprep.subr.bf16.mxu0 0
        %550 = vmatpush2.bf16.msra.mxu0 0
        %551 = vmatprep.subr.bf16.mxu0 0
        %552 = vmatpush2.bf16.msra.mxu0 0
        %553 = vmatprep.subr.bf16.mxu0 0
        %554 = vmatpush2.bf16.msra.mxu0 0
        %555 = vmatprep.mubr.bf16.mxu0 0
        %556 = vmatmul.mubr.bf16.gmra.mxu0 %v458
        %v557 = vpop.f32.mrf.mxu0
        %v558 = vadd.f32 %v509, %v557
        %v559 = vpop.f32.mrf.mxu0
        %v560 = vpop.f32.mrf.mxu0
        %v561 = vpop.f32.mrf.mxu0
        %562 = vdwg.mxu0
        %v563 = vld [vmem:[#allocation8] sm:$0xf]
        %v564 = vld [vmem:[#allocation8 + $0x4] sm:$0xf]
        %v565 = vld [vmem:[#allocation8 + $0x8] sm:$0xf]
        %v566 = vld [vmem:[#allocation8 + $0xc] sm:$0xf]
        %v567 = vld [vmem:[%s6] sm:$0x1]
        %v569 = vlaneseq
        %v570 = vshrl.u32 %v569, 7
        %v571 = vsub.s32 0, %v570
        %v572 = vrot.slane %v567, %v571
        %v578 = vunpack.c.l.b16 %v563
        %v579 = vunpack.c.l.b16 %v564
        %v580 = vunpack.c.l.b16 %v565
        %v581 = vunpack.c.l.b16 %v566
        %v582 = vpack.c.b16 %v579, %v578
        %v583 = vpack.c.b16 %v581, %v580
        %586 = vmatprep.subr.bf16.mxu0 0
        %587 = vmatpush1.bf16.msra.mxu0 0
        %588 = vmatprep.subr.bf16.mxu0 0
        %589 = vmatpush1.bf16.msra.mxu0 0
        %590 = vmatprep.subr.bf16.mxu0 0
        %591 = vmatpush1.bf16.msra.mxu0 0
        %592 = vmatprep.subr.bf16.mxu0 0
        %593 = vmatpush1.bf16.msra.mxu0 0
        %594 = vmatprep.subr.bf16.mxu0 0
        %595 = vmatpush1.bf16.msra.mxu0 0
        %596 = vmatprep.subr.bf16.mxu0 0
        %597 = vmatpush1.bf16.msra.mxu0 0
        %598 = vmatprep.subr.bf16.mxu0 0
        %599 = vmatpush1.bf16.msra.mxu0 %v583
        %600 = vmatprep.subr.bf16.mxu0 0
        %601 = vmatpush1.bf16.msra.mxu0 %v582
        %602 = vmatprep.subr.bf16.mxu0 0
        %603 = vmatpush2.bf16.msra.mxu0 0
        %604 = vmatprep.subr.bf16.mxu0 0
        %605 = vmatpush2.bf16.msra.mxu0 0
        %606 = vmatprep.subr.bf16.mxu0 0
        %607 = vmatpush2.bf16.msra.mxu0 0
        %608 = vmatprep.subr.bf16.mxu0 0
        %609 = vmatpush2.bf16.msra.mxu0 0
        %610 = vmatprep.subr.bf16.mxu0 0
        %611 = vmatpush2.bf16.msra.mxu0 0
        %612 = vmatprep.subr.bf16.mxu0 0
        %613 = vmatpush2.bf16.msra.mxu0 0
        %614 = vmatprep.subr.bf16.mxu0 0
        %615 = vmatpush2.bf16.msra.mxu0 0
        %616 = vmatprep.subr.bf16.mxu0 0
        %617 = vmatpush2.bf16.msra.mxu0 0
        %618 = vmatprep.mubr.bf16.mxu0 0
        %619 = vmatmul.mubr.bf16.gmra.mxu0 %v458
        %v620 = vpop.f32.mrf.mxu0
        %v621 = vadd.f32 %v572, %v620
        %v622 = vpop.f32.mrf.mxu0
        %v623 = vpop.f32.mrf.mxu0
        %v624 = vpop.f32.mrf.mxu0
        %625 = vdwg.mxu0
        %v626 = vpack.c.bf16 %v495, %v495
        %vm627 = vcmask 257024
        %628 = vst.msk [vmem:[%s416] sm:$0xf] %vm627, %v626
        %v629 = vpack.c.bf16 %v558, %v558
        %630 = vst.msk [vmem:[%s423] sm:$0xf] %vm627, %v629
        %v631 = vpack.c.bf16 %v621, %v621
        %632 = vst.msk [vmem:[%s430] sm:$0xf] %vm627, %v631
        %s633 = sand.u32 %s208, 1
        %s634 = scalar_lea.sflag [#allocation4], %s633
        %s635 = sand.u32 %s208, 1
        %s636 = smul.addr %s635, 4
        %s637 = scalar_lea.vmem [#allocation10], %s636
        %s638 = sand.u32 %s32, 1
        %s639 = scalar_lea.sflag [#allocation12], %s638
        %s640 = sand.u32 %s236, 1
        %s641 = smul.addr %s640, 4
        %s642 = scalar_lea.vmem [#allocation11], %s641
        %s643 = sand.u32 %s32, 1
        %s644 = scalar_lea.sflag [#allocation12], %s643
        %s645 = sand.u32 %s264, 1
        %s646 = smul.addr %s645, 4
        %s647 = scalar_lea.vmem [#allocation13], %s646
        // Predicated region
        $region65: #{tpu_custom_call.1} parent=47 // pred_check
          %p648 = pneg %p218
        $region66: #{tpu_custom_call.1} parent=47 // pred_check_branch
          %650 = sbr.rel (%p648) target = $region68
        $region67: #{tpu_custom_call.1} parent=47 // pred_region
          %s652 = ssub.s32 64, 64
          %653 = vsyncadd %s634, %s652
          %s654 = sadd.s32 %s37, %s36
          %s655 = smul.addr %s654, 64
          %s656 = scalar_lea.hbm %s7, %s655
          %s658 = sshll.u32 %s637, 4
          %s659 = int_to_ptr.vmem [resolvable:$true] %s658
          %661 = dma.vmem_to_hbm [thread:$0]  %s659, 64, %s656, %s634
        $region68: #{tpu_custom_call.1} parent=47 // pred_fallthru
          _
        // Predicated region
        $region69: #{tpu_custom_call.1} parent=47 // pred_check
          %p662 = pneg %p246
        $region70: #{tpu_custom_call.1} parent=47 // pred_check_branch
          %664 = sbr.rel (%p662) target = $region72
        $region71: #{tpu_custom_call.1} parent=47 // pred_region
          %s666 = ssub.s32 64, 64
          %667 = vsyncadd %s639, %s666
          %s668 = sadd.s32 %s37, %s36
          %s669 = smul.addr %s668, 64
          %s670 = scalar_lea.hbm %s8, %s669
          %s672 = sshll.u32 %s642, 4
          %s673 = int_to_ptr.vmem [resolvable:$true] %s672
          %675 = dma.vmem_to_hbm [thread:$0]  %s673, 64, %s670, %s639
        $region72: #{tpu_custom_call.1} parent=47 // pred_fallthru
          _
        // Predicated region
        $region73: #{tpu_custom_call.1} parent=47 // pred_check
          %p676 = pneg %p274
        $region74: #{tpu_custom_call.1} parent=47 // pred_check_branch
          %678 = sbr.rel (%p676) target = $region76
        $region75: #{tpu_custom_call.1} parent=47 // pred_region
          %s680 = ssub.s32 64, 64
          %681 = vsyncadd %s644, %s680
          %s682 = sadd.s32 %s37, %s36
          %s683 = smul.addr %s682, 64
          %s684 = scalar_lea.hbm %s9, %s683
          %s686 = sshll.u32 %s647, 4
          %s687 = int_to_ptr.vmem [resolvable:$true] %s686
          %689 = dma.vmem_to_hbm [thread:$0]  %s687, 64, %s684, %s644
        $region76: #{tpu_custom_call.1} parent=47 // pred_fallthru
          _
      $region48: #{tpu_custom_call.1} parent=5 // pred_fallthru
        _
      %p690 = scmp.le.s32.totalorder 2, %s27
      // Predicated region
      $region77: #{tpu_custom_call.1} parent=5 // pred_check
        %p691 = pneg %p690
      $region78: #{tpu_custom_call.1} parent=5 // pred_check_branch
        %693 = sbr.rel (%p691) target = $region80
      $region79: #{tpu_custom_call.1} parent=5 // pred_region
        %s694 = ssub.s32 %s27, 2
        // Predicated region
        $region81: #{tpu_custom_call.1} parent=79 // pred_check
          %p695 = pneg %p224
        $region82: #{tpu_custom_call.1} parent=79 // pred_check_branch
          %697 = sbr.rel (%p695) target = $region84
        $region83: #{tpu_custom_call.1} parent=79 // pred_region
          %s698 = sand.u32 %s209, 1
          %s699 = scalar_lea.sflag [#allocation4], %s698
          %s700 = sand.u32 %s209, 1
          %s701 = smul.addr %s700, 4
          %s702 = scalar_lea.vmem [#allocation10], %s701
          %703 = dma.done %s699, 64
        $region84: #{tpu_custom_call.1} parent=79 // pred_fallthru
          _
        // Predicated region
        $region85: #{tpu_custom_call.1} parent=79 // pred_check
          %p704 = pneg %p252
        $region86: #{tpu_custom_call.1} parent=79 // pred_check_branch
          %706 = sbr.rel (%p704) target = $region88
        $region87: #{tpu_custom_call.1} parent=79 // pred_region
          %s707 = sand.u32 %s33, 1
          %s708 = scalar_lea.sflag [#allocation12], %s707
          %s709 = sand.u32 %s237, 1
          %s710 = smul.addr %s709, 4
          %s711 = scalar_lea.vmem [#allocation11], %s710
          %712 = dma.done %s708, 64
        $region88: #{tpu_custom_call.1} parent=79 // pred_fallthru
          _
        // Predicated region
        $region89: #{tpu_custom_call.1} parent=79 // pred_check
          %p713 = pneg %p280
        $region90: #{tpu_custom_call.1} parent=79 // pred_check_branch
          %715 = sbr.rel (%p713) target = $region92
        $region91: #{tpu_custom_call.1} parent=79 // pred_region
          %s716 = sand.u32 %s33, 1
          %s717 = scalar_lea.sflag [#allocation12], %s716
          %s718 = sand.u32 %s265, 1
          %s719 = smul.addr %s718, 4
          %s720 = scalar_lea.vmem [#allocation13], %s719
          %721 = dma.done %s717, 64
        $region92: #{tpu_custom_call.1} parent=79 // pred_fallthru
          _
      $region80: #{tpu_custom_call.1} parent=5 // pred_fallthru
        _
    $region6: #{tpu_custom_call.1} parent=1 // loop_footer
      %s31 = sadd.s32 1, %s27
    $region7: #{tpu_custom_call.1} parent=1 // loop_footer_branch
      %26 = sbr.rel target = $region3
    $region8: #{tpu_custom_call.1} parent=1 // loop_exit
      _
    %722 = vsyncpa [#allocation3], 1
    %s723 = scalar_lea.sflag [#allocation3], 1
    %724 = vsyncpa %s723, 1
    %725 = vsyncpa [#allocation6], 1
    %726 = vsyncpa [#allocation9], 1
    %727 = vsyncpa [#allocation4], 1
    %s728 = scalar_lea.sflag [#allocation4], 1
    %729 = vsyncpa %s728, 1
    %730 = vsyncpa [#allocation12], 1
    %s731 = scalar_lea.sflag [#allocation12], 1
    %732 = vsyncpa %s731, 1

</llo_original>
